<compile_context>
chip_gen: v7x
topology: tpu7x:2x2x1
jax: 0.10.0
libtpu: 0.0.40
codegen_flags: <defaults>
</compile_context>

<pallas_src>
import jax
import jax.numpy as jnp
from jax.experimental import pallas as pl
from jax.experimental.pallas import tpu as pltpu


def build_pos_enc(max_len: int = 512, d_model: int = 16, dtype=jnp.float32) -> jnp.ndarray:
    """Sinusoidal table matching the torch __init__:
       pos_enc[:, 0::2] = cos(pos * w), pos_enc[:, 1::2] = sin(pos * w)."""
    assert d_model % 2 == 0, "d_model must be even (same constraint as the torch module)"
    pos = jnp.arange(0, max_len, dtype=jnp.float32).reshape(-1, 1)              # (max_len, 1)
    w_vector = 10000.0 ** (
        -2.0 * jnp.arange(0, d_model // 2, dtype=jnp.float32) / d_model
    )                                                                            # (d_model//2,)
    angles = pos * w_vector                                                      # (max_len, d_model//2)
    pe = jnp.zeros((max_len, d_model), dtype=jnp.float32)
    pe = pe.at[:, 0::2].set(jnp.cos(angles))
    pe = pe.at[:, 1::2].set(jnp.sin(angles))
    return pe.astype(dtype)


def _pos_enc_add_kernel(x_ref, pe_ref, o_ref):
    # x_ref / pe_ref / o_ref: (R, L) dense tiles (batch dim squeezed out of x/o).
    o_ref[...] = (x_ref[...] + pe_ref[...]).astype(o_ref.dtype)


_LANE_CANDIDATES = (1024, 512, 256, 128)
_BLOCK_BYTE_TARGET = 2 * 1024 * 1024  # ~2 MiB payload per block (review: 1-2 MiB sweet spot)


def _choose_tiling(sd: int, itemsize: int):
    """Pick (L, rows, R): last-dim lane width L (multiple of 128 dividing S*D),
    total rows = S*D // L, and block rows R (multiple of the dtype's sublane pack,
    ~_BLOCK_BYTE_TARGET payload). Returns None if no 128-multiple divides S*D."""
    lane = next((c for c in _LANE_CANDIDATES if sd % c == 0), None)
    if lane is None:
        return None
    rows = sd // lane
    sub_mult = max(8, 32 // itemsize)          # 8 for f32, 16 for bf16, 32 for int8/fp8
    target_rows = max(sub_mult, _BLOCK_BYTE_TARGET // (lane * itemsize))
    if rows <= target_rows or rows <= sub_mult:
        r = rows                                # full second-to-last dim (always legal)
    else:
        r = (target_rows // sub_mult) * sub_mult
    return lane, rows, r


def _vmem_limit_bytes(block_bytes: int) -> int:
    """Generation-aware VMEM budget: 3 streams x 2 buffers of real payload + headroom,
    never more than ~half of physical VMEM (v7x has only 64 MiB physical)."""
    need = 6 * block_bytes
    limit = max(16 << 20, 2 * need)
    cap = 32 << 20
    try:
        info = pltpu.get_tpu_info()
        cap = min(cap, int(info.vmem_capacity_bytes) // 2)
    except Exception:
        pass
    return int(min(limit, cap))


def positional_encoding_forward(x: jnp.ndarray, pos_enc: jnp.ndarray,
                                *, min_pallas_bytes: int = 1 << 20) -> jnp.ndarray:
    """x: [B, S, D]; pos_enc: [max_len, D].  Returns x + pos_enc[:S][None].

    Note: for input_output_aliases={0: 0} to actually save an HBM copy, the caller
    must donate x at its jit boundary (jax.jit(..., donate_argnums=...)); without
    donation XLA inserts a defensive copy (still correct, just extra traffic).
    """
    B, S, D = x.shape
    SD = S * D
    itemsize = jnp.dtype(x.dtype).itemsize

    # Cheap when pos_enc was built in x.dtype (build_pos_enc(dtype=...)): the astype
    # is a no-op and only a slice+reshape remains in front of the pallas_call.
    pe = pos_enc[:S, :].astype(x.dtype)

    tiling = _choose_tiling(SD, itemsize)
    if tiling is None or x.size * itemsize < min_pallas_bytes:
        # Tiny tensor (pallas_call fixed overhead dominates) or S*D not a multiple of
        # 128: a fused XLA add is at least as fast and always legal.
        # TODO(synk): could pad S*D up to a 128 multiple instead of falling back.
        return x + pe[None, :, :]

    L, rows, R = tiling
    n_row_tiles = pl.cdiv(rows, R)
    block_bytes = R * L * itemsize

    x3 = x.reshape(B, rows, L)        # lane- and sublane-dense layout
    pe2 = pe.reshape(rows, L)

    out = pl.pallas_call(
        _pos_enc_add_kernel,
        out_shape=jax.ShapeDtypeStruct((B, rows, L), x.dtype),
        grid_spec=pltpu.PrefetchScalarGridSpec(
            num_scalar_prefetch=0,
            # Row-tile axis outermost, batch innermost: the PE tile's block index is
            # independent of b, so it stays VMEM-resident across the batch loop
            # (PE read from HBM once per tile, not once per (tile, batch)).
            grid=(n_row_tiles, B),
            in_specs=[
                pl.BlockSpec((None, R, L), lambda t, b: (b, t, 0)),   # x tile (batch squeezed)
                pl.BlockSpec((R, L), lambda t, b: (t, 0)),            # PE tile (b-independent)
            ],
            out_specs=pl.BlockSpec((None, R, L), lambda t, b: (b, t, 0)),
        ),
        compiler_params=pltpu.CompilerParams(
            # No reduction axis and injective output index map -> both axes parallel,
            # so a 2-TensorCore chip (v7x) splits work even when n_row_tiles == 1.
            dimension_semantics=("parallel", "parallel"),
            vmem_limit_bytes=_vmem_limit_bytes(block_bytes),
        ),
        input_output_aliases={0: 0},   # donate x's buffer to the output (if caller donates)
    )(x3, pe2)

    return out.reshape(B, S, D)


if __name__ == "__main__":
    max_len, d_model = 512, 16
    batch, seq_len = 2, 8

    key = jax.random.PRNGKey(0)
    x = jax.random.normal(key, (batch, seq_len, d_model), dtype=jnp.float32)

    # Build the table once in the activation dtype (hoists the cast out of forward).
    pos_enc = build_pos_enc(max_len, d_model, dtype=x.dtype)

    # Reference computed before the kernel call (kernel may alias/donate x's buffer).
    ref = jax.block_until_ready(x + pos_enc[:seq_len, :][None, :, :])

    # Force the Pallas path for this tiny demo shape (the default min_pallas_bytes
    # threshold would correctly route it to the XLA fallback).
    out = positional_encoding_forward(x, pos_enc, min_pallas_bytes=0)
    out = jax.block_until_ready(out)
    assert out.shape == (batch, seq_len, d_model)
    assert jnp.allclose(out, ref, atol=1e-6), "mismatch vs reference (small shape)"

    # Slightly larger shape exercising the sublane-dense (R=8, L=1024) tiling path.
    b2, s2 = 4, 512
    x2 = jax.random.normal(jax.random.PRNGKey(1), (b2, s2, d_model), dtype=jnp.float32)
    ref2 = jax.block_until_ready(x2 + pos_enc[:s2, :][None, :, :])
    out2 = jax.block_until_ready(positional_encoding_forward(x2, pos_enc, min_pallas_bytes=0))
    assert out2.shape == (b2, s2, d_model)
    assert jnp.allclose(out2, ref2, atol=1e-6), "mismatch vs reference (dense-tile shape)"

    print("KERNEL_OK")
</pallas_src>

<mosaic_0001>
module attributes {stable_mosaic.version = 11 : i64} {
  func.func @_pos_enc_add_kernel(%arg0: i32, %arg1: i32, %arg2: memref<1x1x128xf32, #tpu.memory_space<vmem>>, %arg3: memref<1x128xf32, #tpu.memory_space<vmem>>, %arg4: memref<1x1x128xf32, #tpu.memory_space<vmem>>) attributes {dimension_semantics = [#tpu.dimension_semantics<parallel>, #tpu.dimension_semantics<parallel>], iteration_bounds = array<i64: 1, 2>, scalar_prefetch = 0 : i64, scratch_operands = 0 : i64, tpu.core_type = #tpu.core_type<tc>, window_params = [{transform_indices = @transform_0, window_bounds = array<i64: 1, 1, 128>}, {transform_indices = @transform_1, window_bounds = array<i64: 1, 128>}, {transform_indices = @transform_2, window_bounds = array<i64: 1, 1, 128>}]} {
    %c0 = arith.constant 0 : index
    %c0_0 = arith.constant 0 : index
    %c0_1 = arith.constant 0 : index
    %0 = vector.load %arg2[%c0, %c0_0, %c0_1] : memref<1x1x128xf32, #tpu.memory_space<vmem>>, vector<1x1x128xf32>
    %1 = vector.shape_cast %0 : vector<1x1x128xf32> to vector<1x128xf32>
    %c0_2 = arith.constant 0 : index
    %c0_3 = arith.constant 0 : index
    %2 = vector.load %arg3[%c0_2, %c0_3] : memref<1x128xf32, #tpu.memory_space<vmem>>, vector<1x128xf32>
    %3 = arith.addf %1, %2 : vector<1x128xf32>
    %c0_4 = arith.constant 0 : index
    %c0_5 = arith.constant 0 : index
    %c0_6 = arith.constant 0 : index
    %4 = vector.load %arg4[%c0_4, %c0_5, %c0_6] : memref<1x1x128xf32, #tpu.memory_space<vmem>>, vector<1x1x128xf32>
    %5 = vector.shape_cast %4 : vector<1x1x128xf32> to vector<1x128xf32>
    %6 = vector.shape_cast %3 : vector<1x128xf32> to vector<1x1x128xf32>
    tpu.vector_store %arg4[%c0_4, %c0_5, %c0_6], %6 {strides = array<i32>} : memref<1x1x128xf32, #tpu.memory_space<vmem>>, vector<1x1x128xf32>,
    return
  }
  func.func @transform_0(%arg0: i32, %arg1: i32) -> (i32, i32, i32) {
    %c0_i32 = arith.constant 0 : i32
    %c0_i32_0 = arith.constant 0 : i32
    return %arg1, %arg0, %c0_i32 : i32, i32, i32
  }
  func.func @transform_1(%arg0: i32, %arg1: i32) -> (i32, i32) {
    %c0_i32 = arith.constant 0 : i32
    %c0_i32_0 = arith.constant 0 : i32
    return %arg0, %c0_i32 : i32, i32
  }
  func.func @transform_2(%arg0: i32, %arg1: i32) -> (i32, i32, i32) {
    %c0_i32 = arith.constant 0 : i32
    %c0_i32_0 = arith.constant 0 : i32
    return %arg1, %arg0, %c0_i32 : i32, i32, i32
  }
}

</mosaic_0001>

<llo_original>
// kernel: tpu_custom_call.1
$region0: #{tpu_custom_call.1}
  #allocation0 [shape = 'u32[]', space=smem, size = 0x4, offset = 0x4, fixed_abs, tag = 'smem constant byte address 0x4 - core index']
  #allocation1 [shape = 'u32[144,128]{1,0:T(1,128)}', space=vmem, size = 0x12000, scoped, tag = 'internal scratch']
  %s0 = inlined_call_operand.hbm [shape: f32[2,1,128], index: 0, kind: input, shape index: {}, may-alias: {0,2}]
  %s1 = inlined_call_operand.vmem [shape: f32[1,128], index: 1, kind: input, shape index: {}]
  %s2 = inlined_call_operand.hbm [shape: f32[2,1,128], index: 2, kind: output, shape index: {}, may-alias: {0,2}]
  %s3 = sld [smem:[#allocation0]]
  $region45: #{tpu_custom_call.1} parent=0
    _
  %s5 = ssub.s32 1, %s3
  %s6 = scalar_select 0, %s5, %s3
  $region1: #{tpu_custom_call.1} parent=0
    #allocation2 [shape = 'u8[1024]{0}', space=vmem, size = 0x400, scoped, tag = 'input window, operand 0']
    #allocation3 [shape = 's32[2]{0}', space=sflag, size = 0x8, scoped, tag = 'scoped memory for tpu_custom_call.1']
    #allocation4 [shape = 's32[2]{0}', space=sflag, size = 0x8, scoped, tag = 'scoped memory for tpu_custom_call.1']
    #allocation5 [shape = 'u8[1024]{0}', space=vmem, size = 0x400, scoped, tag = 'output window, operand 0']
    %7 = vsyncpa [#allocation3], 0
    %s8 = scalar_lea.sflag [#allocation3], 1
    %9 = vsyncpa %s8, 0
    %10 = vsyncpa [#allocation4], 0
    %s11 = scalar_lea.sflag [#allocation4], 1
    %12 = vsyncpa %s11, 0
    loop: start=0, step=1, limit=4
    $region2: #{tpu_custom_call.1} parent=1 // loop_pre_header
      _
    $region3: #{tpu_custom_call.1} parent=1 // loop_header
      %s14 = sphi 0, %s18
      %p15 = scmp.ge.s32.totalorder %s14, 4
      %s21 = sphi 0, %s33
      %s22 = sphi 0, %s29
      %s23 = sphi 0, %s21
      %s24 = sphi 0, %s22
      %s25 = sphi 0, %s23
      %s26 = sphi 0, %s24
      %s38 = sphi 0, %s40
      %s41 = sphi 0, %s38
      %s42 = sphi 0, %s41
      %s58 = sphi 0, %s42
      %s64 = sphi 0, %s66
      %s67 = sphi 0, %s64
      %s68 = sphi 0, %s67
      %s84 = sphi 0, %s68
      %s92 = sphi 0, %s94
      %s95 = sphi 0, %s92
      %s96 = sphi 0, %s95
      %s112 = sphi 0, %s96
    $region4: #{tpu_custom_call.1} parent=1 // loop_header_branch
      %17 = sbr.rel (%p15) target = $region8
    $region5: #{tpu_custom_call.1} parent=1 // loop_body
      %s19 = ssub.s32 %s14, 1
      %s20 = ssub.s32 %s14, 2
      %s27 = sadd.s32 1, %s22
      %p28 = scmp.ge.s32.totalorder %s27, 2
      %s29 = scalar_select %p28, 0, %s27
      %s30 = sadd.s32 1, %s21
      %s31 = scalar_select %p28, %s30, %s21
      %p32 = scmp.ge.s32.totalorder %s31, 1
      %s33 = scalar_select %p32, 0, %s31
      %s34 = ssub.s32 %s22, %s29
      %s35 = ssub.s32 %s21, %s33
      %s36 = sor.u32 %s34, %s35
      %p37 = scmp.eq.s32.totalorder %s36, 0
      %s39 = sadd.s32 %s38, 1
      %s40 = scalar_select %p37, %s38, %s39
      %p43 = pneg %p37
      %p44 = scmp.eq.s32.totalorder %s14, 1
      %p45 = por %p43, %p44
      %p46 = scmp.ne.s32.totalorder %s38, %s41
      %p47 = scmp.eq.s32.totalorder %s14, 0
      %p48 = por %p46, %p47
      %p49 = scmp.ne.s32.totalorder %s38, %s41
      %p50 = scmp.eq.s32.totalorder %s19, 1
      %p51 = por %p49, %p50
      %p52 = scmp.ne.s32.totalorder %s41, %s42
      %p53 = scmp.eq.s32.totalorder %s19, 0
      %p54 = por %p52, %p53
      %p55 = scmp.ne.s32.totalorder %s41, %s42
      %p56 = scmp.eq.s32.totalorder %s20, 1
      %p57 = por %p55, %p56
      %p59 = scmp.ne.s32.totalorder %s42, %s58
      %p60 = scmp.eq.s32.totalorder %s20, 0
      %p61 = por %p59, %p60
      %s62 = ssub.s32 %s21, %s33
      %p63 = scmp.eq.s32.totalorder %s62, 0
      %s65 = sadd.s32 %s64, 1
      %s66 = scalar_select %p63, %s64, %s65
      %p69 = pneg %p63
      %p70 = scmp.eq.s32.totalorder %s14, 1
      %p71 = por %p69, %p70
      %p72 = scmp.ne.s32.totalorder %s64, %s67
      %p73 = scmp.eq.s32.totalorder %s14, 0
      %p74 = por %p72, %p73
      %p75 = scmp.ne.s32.totalorder %s64, %s67
      %p76 = scmp.eq.s32.totalorder %s19, 1
      %p77 = por %p75, %p76
      %p78 = scmp.ne.s32.totalorder %s67, %s68
      %p79 = scmp.eq.s32.totalorder %s19, 0
      %p80 = por %p78, %p79
      %p81 = scmp.ne.s32.totalorder %s67, %s68
      %p82 = scmp.eq.s32.totalorder %s20, 1
      %p83 = por %p81, %p82
      %p85 = scmp.ne.s32.totalorder %s68, %s84
      %p86 = scmp.eq.s32.totalorder %s20, 0
      %p87 = por %p85, %p86
      %s88 = ssub.s32 %s22, %s29
      %s89 = ssub.s32 %s21, %s33
      %s90 = sor.u32 %s88, %s89
      %p91 = scmp.eq.s32.totalorder %s90, 0
      %s93 = sadd.s32 %s92, 1
      %s94 = scalar_select %p91, %s92, %s93
      %p97 = pneg %p91
      %p98 = scmp.eq.s32.totalorder %s14, 1
      %p99 = por %p97, %p98
      %p100 = scmp.ne.s32.totalorder %s92, %s95
      %p101 = scmp.eq.s32.totalorder %s14, 0
      %p102 = por %p100, %p101
      %p103 = scmp.ne.s32.totalorder %s92, %s95
      %p104 = scmp.eq.s32.totalorder %s19, 1
      %p105 = por %p103, %p104
      %p106 = scmp.ne.s32.totalorder %s95, %s96
      %p107 = scmp.eq.s32.totalorder %s19, 0
      %p108 = por %p106, %p107
      %p109 = scmp.ne.s32.totalorder %s95, %s96
      %p110 = scmp.eq.s32.totalorder %s20, 1
      %p111 = por %p109, %p110
      %p113 = scmp.ne.s32.totalorder %s96, %s112
      %p114 = scmp.eq.s32.totalorder %s20, 0
      %p115 = por %p113, %p114
      %p116 = scmp.le.s32.totalorder 1, %s14
      %p117 = scmp.lt.s32.totalorder %s14, 3
      %p118 = pnand %p116, %p117
      %p119 = pneg %p118
      // Predicated region
      $region9: #{tpu_custom_call.1} parent=5 // pred_check
        _
      $region10: #{tpu_custom_call.1} parent=5 // pred_check_branch
        %121 = sbr.rel (%p118) target = $region12
      $region11: #{tpu_custom_call.1} parent=5 // pred_region
        %s122 = ssub.s32 %s14, 1
        // Predicated region
        $region13: #{tpu_custom_call.1} parent=11 // pred_check
          %p123 = pneg %p80
        $region14: #{tpu_custom_call.1} parent=11 // pred_check_branch
          %125 = sbr.rel (%p123) target = $region16
        $region15: #{tpu_custom_call.1} parent=11 // pred_region
          %p126 = scmp.lt.s32.totalorder %s23, 0
          %s127 = scalar_select %p126, %s23, 0
          %s128 = scalar_lea.vmem %s1, %s127
        $region16: #{tpu_custom_call.1} parent=11 // pred_fallthru
          _
      $region12: #{tpu_custom_call.1} parent=5 // pred_fallthru
        _
      %p129 = scmp.lt.s32.totalorder %s14, 2
      // Predicated region
      $region17: #{tpu_custom_call.1} parent=5 // pred_check
        %p130 = pneg %p129
      $region18: #{tpu_custom_call.1} parent=5 // pred_check_branch
        %132 = sbr.rel (%p130) target = $region20
      $region19: #{tpu_custom_call.1} parent=5 // pred_region
        // Predicated region
        $region21: #{tpu_custom_call.1} parent=19 // pred_check
          %p133 = pneg %p48
        $region22: #{tpu_custom_call.1} parent=19 // pred_check_branch
          %135 = sbr.rel (%p133) target = $region24
        $region23: #{tpu_custom_call.1} parent=19 // pred_region
          %s136 = sand.u32 %s38, 1
          %s137 = scalar_lea.sflag [#allocation3], %s136
          %s138 = sand.u32 %s38, 1
          %s139 = scalar_lea.vmem [#allocation2], %s138
          %s141 = ssub.s32 16, 16
          %142 = vsyncadd %s137, %s141
          %s143 = sadd.s32 %s21, %s22
          %s144 = smul.addr %s143, 16
          %s145 = scalar_lea.hbm %s0, %s144
          %s147 = sshll.u32 %s139, 4
          %s148 = int_to_ptr.vmem [resolvable:$true] %s147
          %150 = dma.hbm_to_vmem [thread:$0]  %s145, 16, %s148, %s137
        $region24: #{tpu_custom_call.1} parent=19 // pred_fallthru
          _
      $region20: #{tpu_custom_call.1} parent=5 // pred_fallthru
        _
      %p151 = scmp.le.s32.totalorder 1, %s14
      %p152 = scmp.lt.s32.totalorder %s14, 3
      %p153 = pnand %p151, %p152
      %p154 = pneg %p153
      // Predicated region
      $region25: #{tpu_custom_call.1} parent=5 // pred_check
        _
      $region26: #{tpu_custom_call.1} parent=5 // pred_check_branch
        %156 = sbr.rel (%p153) target = $region28
      $region27: #{tpu_custom_call.1} parent=5 // pred_region
        %s157 = ssub.s32 %s14, 1
        %s158 = sand.u32 %s41, 1
        %s159 = scalar_lea.sflag [#allocation3], %s158
        %s160 = sand.u32 %s41, 1
        %s161 = scalar_lea.vmem [#allocation2], %s160
        // Predicated region
        $region29: #{tpu_custom_call.1} parent=27 // pred_check
          %p162 = pneg %p54
        $region30: #{tpu_custom_call.1} parent=27 // pred_check_branch
          %164 = sbr.rel (%p162) target = $region32
        $region31: #{tpu_custom_call.1} parent=27 // pred_region
          %165 = dma.done %s159, 16
        $region32: #{tpu_custom_call.1} parent=27 // pred_fallthru
          _
        %s166 = sand.u32 %s41, 1
        %s167 = scalar_lea.sflag [#allocation3], %s166
        %s168 = sand.u32 %s41, 1
        %s169 = scalar_lea.vmem [#allocation2], %s168
        %p170 = pneg %p54
        %p171 = pneg %p51
        %p172 = scmp.lt.s32.totalorder %s23, 0
        %s173 = scalar_select %p172, %s23, 0
        %s174 = scalar_lea.vmem %s1, %s173
        %p175 = pneg %p80
        %p176 = pneg %p77
        %p177 = pneg %p108
        %p178 = pneg %p105
        %s179 = sand.u32 %s95, 1
        %s180 = scalar_lea.sflag [#allocation4], %s179
        %s181 = sand.u32 %s95, 1
        %s182 = scalar_lea.vmem [#allocation5], %s181
        %p183 = scmp.lt.s32.totalorder %s23, 0
        %s184 = scalar_select %p183, %s23, 0
        %s185 = scalar_lea.vmem %s1, %s184
        %v186 = vld [vmem:[%s161] sm:$0x1]
        %v187 = vld [vmem:[%s185] sm:$0x1]
        %v188 = vadd.f32 %v186, %v187
        %189 = vst [vmem:[%s182] sm:$0x1] %v188
        %s190 = sand.u32 %s95, 1
        %s191 = scalar_lea.sflag [#allocation4], %s190
        %s192 = sand.u32 %s95, 1
        %s193 = scalar_lea.vmem [#allocation5], %s192
        // Predicated region
        $region33: #{tpu_custom_call.1} parent=27 // pred_check
          %p194 = pneg %p105
        $region34: #{tpu_custom_call.1} parent=27 // pred_check_branch
          %196 = sbr.rel (%p194) target = $region36
        $region35: #{tpu_custom_call.1} parent=27 // pred_region
          %s198 = ssub.s32 16, 16
          %199 = vsyncadd %s191, %s198
          %s200 = sadd.s32 %s23, %s24
          %s201 = smul.addr %s200, 16
          %s202 = scalar_lea.hbm %s2, %s201
          %s204 = sshll.u32 %s193, 4
          %s205 = int_to_ptr.vmem [resolvable:$true] %s204
          %207 = dma.vmem_to_hbm [thread:$0]  %s205, 16, %s202, %s191
        $region36: #{tpu_custom_call.1} parent=27 // pred_fallthru
          _
      $region28: #{tpu_custom_call.1} parent=5 // pred_fallthru
        _
      %p208 = scmp.le.s32.totalorder 2, %s14
      // Predicated region
      $region37: #{tpu_custom_call.1} parent=5 // pred_check
        %p209 = pneg %p208
      $region38: #{tpu_custom_call.1} parent=5 // pred_check_branch
        %211 = sbr.rel (%p209) target = $region40
      $region39: #{tpu_custom_call.1} parent=5 // pred_region
        %s212 = ssub.s32 %s14, 2
        // Predicated region
        $region41: #{tpu_custom_call.1} parent=39 // pred_check
          %p213 = pneg %p111
        $region42: #{tpu_custom_call.1} parent=39 // pred_check_branch
          %215 = sbr.rel (%p213) target = $region44
        $region43: #{tpu_custom_call.1} parent=39 // pred_region
          %s216 = sand.u32 %s96, 1
          %s217 = scalar_lea.sflag [#allocation4], %s216
          %s218 = sand.u32 %s96, 1
          %s219 = scalar_lea.vmem [#allocation5], %s218
          %220 = dma.done %s217, 16
        $region44: #{tpu_custom_call.1} parent=39 // pred_fallthru
          _
      $region40: #{tpu_custom_call.1} parent=5 // pred_fallthru
        _
    $region6: #{tpu_custom_call.1} parent=1 // loop_footer
      %s18 = sadd.s32 1, %s14
    $region7: #{tpu_custom_call.1} parent=1 // loop_footer_branch
      %13 = sbr.rel target = $region3
    $region8: #{tpu_custom_call.1} parent=1 // loop_exit
      _
    %221 = vsyncpa [#allocation3], 1
    %s222 = scalar_lea.sflag [#allocation3], 1
    %223 = vsyncpa %s222, 1
    %224 = vsyncpa [#allocation4], 1
    %s225 = scalar_lea.sflag [#allocation4], 1
    %226 = vsyncpa %s225, 1

</llo_original>
